<compile_context>
chip_gen: v5e
topology: v5e:2x2
jax: 0.10.0
libtpu: 0.0.40
codegen_flags: <defaults>
</compile_context>

<pallas_src>
import functools

import jax
import jax.numpy as jnp
from jax.experimental import pallas as pl
from jax.experimental.pallas import tpu as pltpu


def _cdiv(a, b):
    return (a + b - 1) // b


def _round_up(n, m):
    return _cdiv(n, m) * m


def _pad_last_to(a, target):
    pad = target - a.shape[-1]
    if pad:
        a = jnp.pad(a, [(0, 0)] * (a.ndim - 1) + [(0, pad)])
    return a


def decoder_res_cat_kernel(x_ref, w12_ref, b1_ref, g_ref, beta_ref,
                           w2b_ref, b2_ref, o_ref, *, eps, hidden_size, hp):
    # One row tile of the input: [tm, F], kept in its input dtype.
    x = x_ref[...]
    w12 = w12_ref[...]                               # [F, Hp + Oc]  (W1 || W2a)
    xm = x if x.dtype == w12.dtype else x.astype(w12.dtype)

    # Single MXU pass for both x-LHS matmuls, f32 accumulation.
    y = jnp.dot(xm, w12, preferred_element_type=jnp.float32)   # [tm, Hp+Oc]
    h = y[:, :hp] + b1_ref[...]                      # mlp pre-activation [tm, Hp]
    xa = y[:, hp:]                                   # x @ W2a            [tm, Oc]

    # --- LayerNorm over the true hidden_size lanes (padded h lanes are 0) ---
    inv_h = 1.0 / hidden_size
    mu = jnp.sum(h, axis=-1, keepdims=True) * inv_h
    centered = h - mu
    if hp == hidden_size:
        var = jnp.sum(centered * centered, axis=-1, keepdims=True) * inv_h
    else:
        # Mask padded lanes out of the variance only.  Two-pass masked LN kept
        # (numerically safer than E[h^2]-mu^2); negligible in mem-bound regime.
        lane = jax.lax.broadcasted_iota(jnp.int32, h.shape, dimension=1)
        sq = jnp.where(lane < hidden_size, centered * centered, 0.0)
        var = jnp.sum(sq, axis=-1, keepdims=True) * inv_h
    hn = centered * jax.lax.rsqrt(var + eps) * g_ref[...] + beta_ref[...]
    hn = jnp.maximum(hn, 0.0)                        # padded lanes stay 0 (gamma/beta pad = 0)

    # --- fc over the implicit concat([x, mlp(x)]): xa + mlp @ W2b + b2 ---
    w2b = w2b_ref[...]                               # [Hp, Oc]
    hm = hn if hn.dtype == w2b.dtype else hn.astype(w2b.dtype)
    out = xa + jnp.dot(hm, w2b, preferred_element_type=jnp.float32) + b2_ref[...]
    o_ref[...] = out.astype(o_ref.dtype)


def decoder_res_cat(x, params, *, eps=1e-5, tm=1024, param_dtype=None,
                    pad_output=False, vmem_limit_bytes=None):
    """x: [..., in_features] -> [..., out_features]  (or 128-padded if pad_output).

    params = (w1, b1, gamma, beta, w2a, w2b, b2) with weights stored [in, out]
    (transposed vs PyTorch nn.Linear); w2a/w2b are the fc weight split into the
    columns applied to x and to mlp(x) respectively.

    param_dtype=jnp.bfloat16 casts ALL matmul weights to bf16 (and x is cast to
    bf16 for the fused x @ [W1||W2a] pass) — LayerNorm/ReLU and both dot
    accumulations stay f32.  Default (None) keeps everything f32-exact.
    """
    w1, b1, g, beta, w2a, w2b, b2 = params
    F = x.shape[-1]
    H = w1.shape[1]
    O = w2a.shape[1]
    assert w1.shape[0] == F and w2a.shape[0] == F and w2b.shape == (H, O)

    Hp = _round_up(H, 128)                    # hidden axis lane-dense in VMEM
    Oc = _round_up(O, 128) if pad_output else O

    # Weight prep (cheap, weights only; activations are never padded/copied).
    w1p = _pad_last_to(w1, Hp)
    w2ap = _pad_last_to(w2a, Oc) if Oc != O else w2a
    w2bp = _pad_last_to(jnp.pad(w2b, ((0, Hp - H), (0, 0))), Oc)
    b1p = _pad_last_to(b1.reshape(1, H), Hp).astype(jnp.float32)
    gp = _pad_last_to(g.reshape(1, H), Hp).astype(jnp.float32)
    betap = _pad_last_to(beta.reshape(1, H), Hp).astype(jnp.float32)
    b2p = _pad_last_to(b2.reshape(1, O), Oc).astype(jnp.float32)

    if param_dtype is not None:               # e.g. jnp.bfloat16 for bf16 MXU rate
        w1p = w1p.astype(param_dtype)
        w2ap = w2ap.astype(param_dtype)
        w2bp = w2bp.astype(param_dtype)
    # Fused x-LHS weight [W1 || W2a]: one MXU pass, split at a 128 boundary.
    w12 = jnp.concatenate([w1p, w2ap.astype(w1p.dtype)], axis=1)   # [F, Hp+Oc]

    x2 = x.reshape(-1, F)
    N = x2.shape[0]
    x_itemsize = jnp.dtype(x2.dtype).itemsize
    out_itemsize = jnp.dtype(x.dtype).itemsize
    w_itemsize = jnp.dtype(w12.dtype).itemsize

    # Row tile: large (amortize per-step overhead), sublane-correct multiple.
    sub = {4: 8, 2: 16, 1: 32}.get(x_itemsize, 8)
    tm_eff = min(max(sub, _round_up(tm, sub)), _round_up(N, sub))
    # v7x has 2 TensorCores: keep >=2 "parallel" grid steps when each half is
    # still a big tile.  Costs at most one extra step on single-TC v5e/v6e.
    if N >= 1024:
        tm_eff = min(tm_eff, _round_up(_cdiv(N, 2), sub))

    def _vmem_est(t):
        x_buf = 2 * t * F * x_itemsize                       # double-buffered x tile
        o_buf = 2 * t * Oc * out_itemsize                     # double-buffered out tile
        weights = 2 * ((F * (Hp + Oc) + Hp * Oc) * w_itemsize + (3 * Hp + Oc) * 4)
        temps = t * (2 * Hp + 2 * Oc) * 4                     # h / hn / xa / out f32 temps
        return x_buf + o_buf + weights + temps

    budget = (40 << 20) if vmem_limit_bytes is None else int(0.85 * vmem_limit_bytes)
    while tm_eff > sub and _vmem_est(tm_eff) > budget:
        tm_eff = max(sub, _round_up(tm_eff // 2, sub))

    limit = vmem_limit_bytes
    if limit is None and _vmem_est(tm_eff) > (12 << 20):
        limit = 48 << 20       # > v5e/v6e/v7x default scoped limits, < v7x 64 MiB physical

    grid = (_cdiv(N, tm_eff),)
    cp_kwargs = dict(dimension_semantics=("parallel",))
    if limit is not None:
        cp_kwargs["vmem_limit_bytes"] = int(limit)
    compiler_params = pltpu.CompilerParams(**cp_kwargs)

    kernel = functools.partial(decoder_res_cat_kernel, eps=eps,
                               hidden_size=H, hp=Hp)

    def run(single_buffer_weights):
        # Grid-invariant weight/bias blocks are DMA'd once; single buffering
        # halves their VMEM footprint (frees room for bigger row tiles).
        wkw = {"pipeline_mode": pl.Buffered(1)} if single_buffer_weights else {}
        in_specs = [
            pl.BlockSpec((tm_eff, F), lambda i: (i, 0)),            # x row tile
            pl.BlockSpec((F, Hp + Oc), lambda i: (0, 0), **wkw),    # W1 || W2a
            pl.BlockSpec((1, Hp), lambda i: (0, 0), **wkw),         # b1
            pl.BlockSpec((1, Hp), lambda i: (0, 0), **wkw),         # LN gamma
            pl.BlockSpec((1, Hp), lambda i: (0, 0), **wkw),         # LN beta
            pl.BlockSpec((Hp, Oc), lambda i: (0, 0), **wkw),        # W2b
            pl.BlockSpec((1, Oc), lambda i: (0, 0), **wkw),         # b2
        ]
        return pl.pallas_call(
            kernel,
            out_shape=jax.ShapeDtypeStruct((N, Oc), x.dtype),
            grid=grid,
            in_specs=in_specs,
            out_specs=pl.BlockSpec((tm_eff, Oc), lambda i: (i, 0)),
            compiler_params=compiler_params,
        )(x2, w12, b1p, gp, betap, w2bp, b2p)

    try:
        out = run(True)
    except Exception:   # pipeline_mode=pl.Buffered(1) unsupported on this jax version
        out = run(False)

    # No wrapper slice: Oc == O by default; pad_output=True hands the consumer
    # the lane-dense 128-padded feature axis directly.
    return out.reshape(x.shape[:-1] + (Oc,))


def init_params(key, hidden_size, in_features, out_features):
    k1, k2, k3, k4, k5 = jax.random.split(key, 5)
    s1 = float(in_features) ** -0.5
    s2 = float(hidden_size + in_features) ** -0.5
    w1 = jax.random.uniform(k1, (in_features, hidden_size), jnp.float32, -s1, s1)
    b1 = jax.random.uniform(k2, (hidden_size,), jnp.float32, -s1, s1)
    g = jnp.ones((hidden_size,), jnp.float32)
    beta = jnp.zeros((hidden_size,), jnp.float32)
    # fc = nn.Linear(hidden_size + in_features, out_features); weight split along
    # the input dim: W2a multiplies x, W2b multiplies mlp(x).
    w2a = jax.random.uniform(k3, (in_features, out_features), jnp.float32, -s2, s2)
    w2b = jax.random.uniform(k4, (hidden_size, out_features), jnp.float32, -s2, s2)
    b2 = jax.random.uniform(k5, (out_features,), jnp.float32, -s2, s2)
    return (w1, b1, g, beta, w2a, w2b, b2)


def decoder_res_cat_reference(x, params, eps=1e-5):
    w1, b1, g, beta, w2a, w2b, b2 = params
    h = x @ w1 + b1
    mu = jnp.mean(h, axis=-1, keepdims=True)
    var = jnp.mean((h - mu) ** 2, axis=-1, keepdims=True)
    h = (h - mu) * jax.lax.rsqrt(var + eps) * g + beta
    h = jnp.maximum(h, 0.0)
    # fc(concat([x, h], -1)) == x @ W2a + h @ W2b + b2
    return x @ w2a + h @ w2b + b2


if __name__ == "__main__":
    hidden_size = 32
    in_features = 64
    out_features = 60

    key = jax.random.PRNGKey(0)
    kx, kp, kx2 = jax.random.split(key, 3)
    params = init_params(kp, hidden_size, in_features, out_features)

    # Small shapes consistent with the module: [batch, seq, in_features].
    batch, seq = 2, 8
    x = jax.random.normal(kx, (batch, seq, in_features), jnp.float32)

    out = jax.block_until_ready(decoder_res_cat(x, params))
    ref = decoder_res_cat_reference(x, params)
    assert out.shape == (batch, seq, out_features)
    assert jnp.allclose(out, ref, atol=1e-3, rtol=1e-3), \
        float(jnp.max(jnp.abs(out - ref)))

    # Second run: multi-step grid with a partial (masked) last row block:
    # 300 rows with a 64-row tile -> 5 grid steps, last block has 44 valid rows.
    x2 = jax.random.normal(kx2, (4, 75, in_features), jnp.float32)
    out2 = jax.block_until_ready(decoder_res_cat(x2, params, tm=64))
    ref2 = decoder_res_cat_reference(x2, params)
    assert out2.shape == (4, 75, out_features)
    assert jnp.allclose(out2, ref2, atol=1e-3, rtol=1e-3), \
        float(jnp.max(jnp.abs(out2 - ref2)))

    print("KERNEL_OK")
</pallas_src>

<mosaic_0001>
module attributes {stable_mosaic.version = 11 : i64} {
  func.func @decoder_res_cat_kernel(%arg0: i32, %arg1: memref<16x64xf32, #tpu.memory_space<vmem>>, %arg2: memref<64x188xf32, #tpu.memory_space<vmem>>, %arg3: memref<1x128xf32, #tpu.memory_space<vmem>>, %arg4: memref<1x128xf32, #tpu.memory_space<vmem>>, %arg5: memref<1x128xf32, #tpu.memory_space<vmem>>, %arg6: memref<128x60xf32, #tpu.memory_space<vmem>>, %arg7: memref<1x60xf32, #tpu.memory_space<vmem>>, %arg8: memref<16x60xf32, #tpu.memory_space<vmem>>) attributes {dimension_semantics = [#tpu.dimension_semantics<parallel>], iteration_bounds = array<i64: 1>, scalar_prefetch = 0 : i64, scratch_operands = 0 : i64, tpu.core_type = #tpu.core_type<tc>, window_params = [{transform_indices = @transform_0, window_bounds = array<i64: 16, 64>}, {pipeline_mode = #tpu.pipeline_mode<synchronous>, transform_indices = @transform_1, window_bounds = array<i64: 64, 188>}, {pipeline_mode = #tpu.pipeline_mode<synchronous>, transform_indices = @transform_2, window_bounds = array<i64: 1, 128>}, {pipeline_mode = #tpu.pipeline_mode<synchronous>, transform_indices = @transform_3, window_bounds = array<i64: 1, 128>}, {pipeline_mode = #tpu.pipeline_mode<synchronous>, transform_indices = @transform_4, window_bounds = array<i64: 1, 128>}, {pipeline_mode = #tpu.pipeline_mode<synchronous>, transform_indices = @transform_5, window_bounds = array<i64: 128, 60>}, {pipeline_mode = #tpu.pipeline_mode<synchronous>, transform_indices = @transform_6, window_bounds = array<i64: 1, 60>}, {transform_indices = @transform_7, window_bounds = array<i64: 16, 60>}]} {
    %c0 = arith.constant 0 : index
    %c0_0 = arith.constant 0 : index
    %0 = vector.load %arg1[%c0, %c0_0] : memref<16x64xf32, #tpu.memory_space<vmem>>, vector<16x64xf32>
    %c0_1 = arith.constant 0 : index
    %c0_2 = arith.constant 0 : index
    %1 = vector.load %arg2[%c0_1, %c0_2] : memref<64x188xf32, #tpu.memory_space<vmem>>, vector<64x188xf32>
    %cst = arith.constant dense<0.000000e+00> : vector<16x188xf32>
    %2 = tpu.matmul %0, %1, %cst {dimension_numbers = #tpu.dot_dimension_numbers<[1], [0], [0], [1], [0, 0, 1, 1], [], []>} : vector<16x64xf32>, vector<64x188xf32>, vector<16x188xf32> -> vector<16x188xf32>
    %3 = vector.extract_strided_slice %2 {offsets = [0, 0], sizes = [16, 128], strides = [1, 1]} : vector<16x188xf32> to vector<16x128xf32>
    %c0_3 = arith.constant 0 : index
    %c0_4 = arith.constant 0 : index
    %4 = vector.load %arg3[%c0_3, %c0_4] : memref<1x128xf32, #tpu.memory_space<vmem>>, vector<1x128xf32>
    %5 = vector.broadcast %4 : vector<1x128xf32> to vector<16x128xf32>
    %6 = arith.addf %3, %5 : vector<16x128xf32>
    %7 = vector.extract_strided_slice %2 {offsets = [0, 128], sizes = [16, 60], strides = [1, 1]} : vector<16x188xf32> to vector<16x60xf32>
    %cst_5 = arith.constant dense<0.000000e+00> : vector<16xf32>
    %8 = vector.multi_reduction <add>, %6, %cst_5 [1] : vector<16x128xf32> to vector<16xf32>
    %9 = vector.shape_cast %8 : vector<16xf32> to vector<16x1xf32>
    %cst_6 = arith.constant 3.125000e-02 : f32
    %10 = vector.broadcast %cst_6 : f32 to vector<16x1xf32>
    %11 = arith.mulf %9, %10 : vector<16x1xf32>
    %12 = vector.broadcast %11 : vector<16x1xf32> to vector<16x128xf32>
    %13 = arith.subf %6, %12 : vector<16x128xf32>
    %14 = tpu.iota {dimensions = array<i32: 1>} : vector<16x128xi32>
    %c32_i32 = arith.constant 32 : i32
    %15 = vector.broadcast %c32_i32 : i32 to vector<16x128xi32>
    %16 = arith.cmpi slt, %14, %15 : vector<16x128xi32>
    %17 = arith.mulf %13, %13 : vector<16x128xf32>
    %cst_7 = arith.constant 0.000000e+00 : f32
    %18 = vector.broadcast %cst_7 : f32 to vector<16x128xf32>
    %19 = arith.select %16, %17, %18 : vector<16x128xi1>, vector<16x128xf32>
    %cst_8 = arith.constant dense<0.000000e+00> : vector<16xf32>
    %20 = vector.multi_reduction <add>, %19, %cst_8 [1] : vector<16x128xf32> to vector<16xf32>
    %21 = vector.shape_cast %20 : vector<16xf32> to vector<16x1xf32>
    %cst_9 = arith.constant 3.125000e-02 : f32
    %22 = vector.broadcast %cst_9 : f32 to vector<16x1xf32>
    %23 = arith.mulf %21, %22 : vector<16x1xf32>
    %cst_10 = arith.constant 9.99999974E-6 : f32
    %24 = vector.broadcast %cst_10 : f32 to vector<16x1xf32>
    %25 = arith.addf %23, %24 : vector<16x1xf32>
    %26 = math.rsqrt %25 : vector<16x1xf32>
    %27 = vector.broadcast %26 : vector<16x1xf32> to vector<16x128xf32>
    %28 = arith.mulf %13, %27 : vector<16x128xf32>
    %c0_11 = arith.constant 0 : index
    %c0_12 = arith.constant 0 : index
    %29 = vector.load %arg4[%c0_11, %c0_12] : memref<1x128xf32, #tpu.memory_space<vmem>>, vector<1x128xf32>
    %30 = vector.broadcast %29 : vector<1x128xf32> to vector<16x128xf32>
    %31 = arith.mulf %28, %30 : vector<16x128xf32>
    %c0_13 = arith.constant 0 : index
    %c0_14 = arith.constant 0 : index
    %32 = vector.load %arg5[%c0_13, %c0_14] : memref<1x128xf32, #tpu.memory_space<vmem>>, vector<1x128xf32>
    %33 = vector.broadcast %32 : vector<1x128xf32> to vector<16x128xf32>
    %34 = arith.addf %31, %33 : vector<16x128xf32>
    %cst_15 = arith.constant 0.000000e+00 : f32
    %35 = vector.broadcast %cst_15 : f32 to vector<16x128xf32>
    %36 = arith.maximumf %34, %35 : vector<16x128xf32>
    %c0_16 = arith.constant 0 : index
    %c0_17 = arith.constant 0 : index
    %37 = vector.load %arg6[%c0_16, %c0_17] : memref<128x60xf32, #tpu.memory_space<vmem>>, vector<128x60xf32>
    %cst_18 = arith.constant dense<0.000000e+00> : vector<16x60xf32>
    %38 = tpu.matmul %36, %37, %cst_18 {dimension_numbers = #tpu.dot_dimension_numbers<[1], [0], [0], [1], [0, 0, 1, 1], [], []>} : vector<16x128xf32>, vector<128x60xf32>, vector<16x60xf32> -> vector<16x60xf32>
    %39 = arith.addf %7, %38 : vector<16x60xf32>
    %c0_19 = arith.constant 0 : index
    %c0_20 = arith.constant 0 : index
    %40 = vector.load %arg7[%c0_19, %c0_20] : memref<1x60xf32, #tpu.memory_space<vmem>>, vector<1x60xf32>
    %41 = vector.broadcast %40 : vector<1x60xf32> to vector<16x60xf32>
    %42 = arith.addf %39, %41 : vector<16x60xf32>
    %c0_21 = arith.constant 0 : index
    %c0_22 = arith.constant 0 : index
    %43 = vector.load %arg8[%c0_21, %c0_22] : memref<16x60xf32, #tpu.memory_space<vmem>>, vector<16x60xf32>
    tpu.vector_store %arg8[%c0_21, %c0_22], %42 {strides = array<i32>} : memref<16x60xf32, #tpu.memory_space<vmem>>, vector<16x60xf32>,
    return
  }
  func.func @transform_0(%arg0: i32) -> (i32, i32) {
    %c0_i32 = arith.constant 0 : i32
    %c0_i32_0 = arith.constant 0 : i32
    return %arg0, %c0_i32 : i32, i32
  }
  func.func @transform_1(%arg0: i32) -> (i32, i32) {
    %c0_i32 = arith.constant 0 : i32
    %c0_i32_0 = arith.constant 0 : i32
    %c0_i32_1 = arith.constant 0 : i32
    return %c0_i32, %c0_i32_0 : i32, i32
  }
  func.func @transform_2(%arg0: i32) -> (i32, i32) {
    %c0_i32 = arith.constant 0 : i32
    %c0_i32_0 = arith.constant 0 : i32
    %c0_i32_1 = arith.constant 0 : i32
    return %c0_i32, %c0_i32_0 : i32, i32
  }
  func.func @transform_3(%arg0: i32) -> (i32, i32) {
    %c0_i32 = arith.constant 0 : i32
    %c0_i32_0 = arith.constant 0 : i32
    %c0_i32_1 = arith.constant 0 : i32
    return %c0_i32, %c0_i32_0 : i32, i32
  }
  func.func @transform_4(%arg0: i32) -> (i32, i32) {
    %c0_i32 = arith.constant 0 : i32
    %c0_i32_0 = arith.constant 0 : i32
    %c0_i32_1 = arith.constant 0 : i32
    return %c0_i32, %c0_i32_0 : i32, i32
  }
  func.func @transform_5(%arg0: i32) -> (i32, i32) {
    %c0_i32 = arith.constant 0 : i32
    %c0_i32_0 = arith.constant 0 : i32
    %c0_i32_1 = arith.constant 0 : i32
    return %c0_i32, %c0_i32_0 : i32, i32
  }
  func.func @transform_6(%arg0: i32) -> (i32, i32) {
    %c0_i32 = arith.constant 0 : i32
    %c0_i32_0 = arith.constant 0 : i32
    %c0_i32_1 = arith.constant 0 : i32
    return %c0_i32, %c0_i32_0 : i32, i32
  }
  func.func @transform_7(%arg0: i32) -> (i32, i32) {
    %c0_i32 = arith.constant 0 : i32
    %c0_i32_0 = arith.constant 0 : i32
    return %arg0, %c0_i32 : i32, i32
  }
}

module attributes {stable_mosaic.version = 11 : i64} {
  func.func @decoder_res_cat_kernel(%arg0: i32, %arg1: memref<16x64xf32, #tpu.memory_space<vmem>>, %arg2: memref<64x188xf32, #tpu.memory_space<vmem>>, %arg3: memref<1x128xf32, #tpu.memory_space<vmem>>, %arg4: memref<1x128xf32, #tpu.memory_space<vmem>>, %arg5: memref<1x128xf32, #tpu.memory_space<vmem>>, %arg6: memref<128x60xf32, #tpu.memory_space<vmem>>, %arg7: memref<1x60xf32, #tpu.memory_space<vmem>>, %arg8: memref<16x60xf32, #tpu.memory_space<vmem>>) attributes {dimension_semantics = [#tpu.dimension_semantics<parallel>], iteration_bounds = array<i64: 1>, scalar_prefetch = 0 : i64, scratch_operands = 0 : i64, tpu.core_type = #tpu.core_type<tc>, window_params = [{transform_indices = @transform_0, window_bounds = array<i64: 16, 64>}, {pipeline_mode = #tpu.pipeline_mode<synchronous>, transform_indices = @transform_1, window_bounds = array<i64: 64, 188>}, {pipeline_mode = #tpu.pipeline_mode<synchronous>, transform_indices = @transform_2, window_bounds = array<i64: 1, 128>}, {pipeline_mode = #tpu.pipeline_mode<synchronous>, transform_indices = @transform_3, window_bounds = array<i64: 1, 128>}, {pipeline_mode = #tpu.pipeline_mode<synchronous>, transform_indices = @transform_4, window_bounds = array<i64: 1, 128>}, {pipeline_mode = #tpu.pipeline_mode<synchronous>, transform_indices = @transform_5, window_bounds = array<i64: 128, 60>}, {pipeline_mode = #tpu.pipeline_mode<synchronous>, transform_indices = @transform_6, window_bounds = array<i64: 1, 60>}, {transform_indices = @transform_7, window_bounds = array<i64: 16, 60>}]} {
    %c0 = arith.constant 0 : index
    %c0_0 = arith.constant 0 : index
    %0 = vector.load %arg1[%c0, %c0_0] : memref<16x64xf32, #tpu.memory_space<vmem>>, vector<16x64xf32>
    %c0_1 = arith.constant 0 : index
    %c0_2 = arith.constant 0 : index
    %1 = vector.load %arg2[%c0_1, %c0_2] : memref<64x188xf32, #tpu.memory_space<vmem>>, vector<64x188xf32>
    %cst = arith.constant dense<0.000000e+00> : vector<16x188xf32>
    %2 = tpu.matmul %0, %1, %cst {dimension_numbers = #tpu.dot_dimension_numbers<[1], [0], [0], [1], [0, 0, 1, 1], [], []>} : vector<16x64xf32>, vector<64x188xf32>, vector<16x188xf32> -> vector<16x188xf32>
    %3 = vector.extract_strided_slice %2 {offsets = [0, 0], sizes = [16, 128], strides = [1, 1]} : vector<16x188xf32> to vector<16x128xf32>
    %c0_3 = arith.constant 0 : index
    %c0_4 = arith.constant 0 : index
    %4 = vector.load %arg3[%c0_3, %c0_4] : memref<1x128xf32, #tpu.memory_space<vmem>>, vector<1x128xf32>
    %5 = vector.broadcast %4 : vector<1x128xf32> to vector<16x128xf32>
    %6 = arith.addf %3, %5 : vector<16x128xf32>
    %7 = vector.extract_strided_slice %2 {offsets = [0, 128], sizes = [16, 60], strides = [1, 1]} : vector<16x188xf32> to vector<16x60xf32>
    %cst_5 = arith.constant dense<0.000000e+00> : vector<16xf32>
    %8 = vector.multi_reduction <add>, %6, %cst_5 [1] : vector<16x128xf32> to vector<16xf32>
    %9 = vector.shape_cast %8 : vector<16xf32> to vector<16x1xf32>
    %cst_6 = arith.constant 3.125000e-02 : f32
    %10 = vector.broadcast %cst_6 : f32 to vector<16x1xf32>
    %11 = arith.mulf %9, %10 : vector<16x1xf32>
    %12 = vector.broadcast %11 : vector<16x1xf32> to vector<16x128xf32>
    %13 = arith.subf %6, %12 : vector<16x128xf32>
    %14 = tpu.iota {dimensions = array<i32: 1>} : vector<16x128xi32>
    %c32_i32 = arith.constant 32 : i32
    %15 = vector.broadcast %c32_i32 : i32 to vector<16x128xi32>
    %16 = arith.cmpi slt, %14, %15 : vector<16x128xi32>
    %17 = arith.mulf %13, %13 : vector<16x128xf32>
    %cst_7 = arith.constant 0.000000e+00 : f32
    %18 = vector.broadcast %cst_7 : f32 to vector<16x128xf32>
    %19 = arith.select %16, %17, %18 : vector<16x128xi1>, vector<16x128xf32>
    %cst_8 = arith.constant dense<0.000000e+00> : vector<16xf32>
    %20 = vector.multi_reduction <add>, %19, %cst_8 [1] : vector<16x128xf32> to vector<16xf32>
    %21 = vector.shape_cast %20 : vector<16xf32> to vector<16x1xf32>
    %cst_9 = arith.constant 3.125000e-02 : f32
    %22 = vector.broadcast %cst_9 : f32 to vector<16x1xf32>
    %23 = arith.mulf %21, %22 : vector<16x1xf32>
    %cst_10 = arith.constant 9.99999974E-6 : f32
    %24 = vector.broadcast %cst_10 : f32 to vector<16x1xf32>
    %25 = arith.addf %23, %24 : vector<16x1xf32>
    %26 = math.rsqrt %25 : vector<16x1xf32>
    %27 = vector.broadcast %26 : vector<16x1xf32> to vector<16x128xf32>
    %28 = arith.mulf %13, %27 : vector<16x128xf32>
    %c0_11 = arith.constant 0 : index
    %c0_12 = arith.constant 0 : index
    %29 = vector.load %arg4[%c0_11, %c0_12] : memref<1x128xf32, #tpu.memory_space<vmem>>, vector<1x128xf32>
    %30 = vector.broadcast %29 : vector<1x128xf32> to vector<16x128xf32>
    %31 = arith.mulf %28, %30 : vector<16x128xf32>
    %c0_13 = arith.constant 0 : index
    %c0_14 = arith.constant 0 : index
    %32 = vector.load %arg5[%c0_13, %c0_14] : memref<1x128xf32, #tpu.memory_space<vmem>>, vector<1x128xf32>
    %33 = vector.broadcast %32 : vector<1x128xf32> to vector<16x128xf32>
    %34 = arith.addf %31, %33 : vector<16x128xf32>
    %cst_15 = arith.constant 0.000000e+00 : f32
    %35 = vector.broadcast %cst_15 : f32 to vector<16x128xf32>
    %36 = arith.maximumf %34, %35 : vector<16x128xf32>
    %c0_16 = arith.constant 0 : index
    %c0_17 = arith.constant 0 : index
    %37 = vector.load %arg6[%c0_16, %c0_17] : memref<128x60xf32, #tpu.memory_space<vmem>>, vector<128x60xf32>
    %cst_18 = arith.constant dense<0.000000e+00> : vector<16x60xf32>
    %38 = tpu.matmul %36, %37, %cst_18 {dimension_numbers = #tpu.dot_dimension_numbers<[1], [0], [0], [1], [0, 0, 1, 1], [], []>} : vector<16x128xf32>, vector<128x60xf32>, vector<16x60xf32> -> vector<16x60xf32>
    %39 = arith.addf %7, %38 : vector<16x60xf32>
    %c0_19 = arith.constant 0 : index
    %c0_20 = arith.constant 0 : index
    %40 = vector.load %arg7[%c0_19, %c0_20] : memref<1x60xf32, #tpu.memory_space<vmem>>, vector<1x60xf32>
    %41 = vector.broadcast %40 : vector<1x60xf32> to vector<16x60xf32>
    %42 = arith.addf %39, %41 : vector<16x60xf32>
    %c0_21 = arith.constant 0 : index
    %c0_22 = arith.constant 0 : index
    %43 = vector.load %arg8[%c0_21, %c0_22] : memref<16x60xf32, #tpu.memory_space<vmem>>, vector<16x60xf32>
    tpu.vector_store %arg8[%c0_21, %c0_22], %42 {strides = array<i32>} : memref<16x60xf32, #tpu.memory_space<vmem>>, vector<16x60xf32>,
    return
  }
  func.func @transform_0(%arg0: i32) -> (i32, i32) {
    %c0_i32 = arith.constant 0 : i32
    %c0_i32_0 = arith.constant 0 : i32
    return %arg0, %c0_i32 : i32, i32
  }
  func.func @transform_1(%arg0: i32) -> (i32, i32) {
    %c0_i32 = arith.constant 0 : i32
    %c0_i32_0 = arith.constant 0 : i32
    %c0_i32_1 = arith.constant 0 : i32
    return %c0_i32, %c0_i32_0 : i32, i32
  }
  func.func @transform_2(%arg0: i32) -> (i32, i32) {
    %c0_i32 = arith.constant 0 : i32
    %c0_i32_0 = arith.constant 0 : i32
    %c0_i32_1 = arith.constant 0 : i32
    return %c0_i32, %c0_i32_0 : i32, i32
  }
  func.func @transform_3(%arg0: i32) -> (i32, i32) {
    %c0_i32 = arith.constant 0 : i32
    %c0_i32_0 = arith.constant 0 : i32
    %c0_i32_1 = arith.constant 0 : i32
    return %c0_i32, %c0_i32_0 : i32, i32
  }
  func.func @transform_4(%arg0: i32) -> (i32, i32) {
    %c0_i32 = arith.constant 0 : i32
    %c0_i32_0 = arith.constant 0 : i32
    %c0_i32_1 = arith.constant 0 : i32
    return %c0_i32, %c0_i32_0 : i32, i32
  }
  func.func @transform_5(%arg0: i32) -> (i32, i32) {
    %c0_i32 = arith.constant 0 : i32
    %c0_i32_0 = arith.constant 0 : i32
    %c0_i32_1 = arith.constant 0 : i32
    return %c0_i32, %c0_i32_0 : i32, i32
  }
  func.func @transform_6(%arg0: i32) -> (i32, i32) {
    %c0_i32 = arith.constant 0 : i32
    %c0_i32_0 = arith.constant 0 : i32
    %c0_i32_1 = arith.constant 0 : i32
    return %c0_i32, %c0_i32_0 : i32, i32
  }
  func.func @transform_7(%arg0: i32) -> (i32, i32) {
    %c0_i32 = arith.constant 0 : i32
    %c0_i32_0 = arith.constant 0 : i32
    return %arg0, %c0_i32 : i32, i32
  }
}

</mosaic_0001>

<llo_original>
// kernel: tpu_custom_call.1
$region0: #{tpu_custom_call.1}
  #allocation0 [shape = 'u32[]', space=smem, size = 0x4, offset = 0x4, fixed_abs, tag = 'smem constant byte address 0x4 - core index']
  #allocation1 [shape = 'u32[72,128]{1,0:T(1,128)}', space=vmem, size = 0x9000, scoped, tag = 'internal scratch']
  %s0 = inlined_call_operand.vmem [shape: f32[16,64], index: 0, kind: input, shape index: {}]
  %s1 = inlined_call_operand.vmem [shape: f32[64,188], index: 1, kind: input, shape index: {}]
  %s2 = inlined_call_operand.vmem [shape: f32[1,128], index: 2, kind: input, shape index: {}]
  %s3 = inlined_call_operand.vmem [shape: f32[1,128], index: 3, kind: input, shape index: {}]
  %s4 = inlined_call_operand.vmem [shape: f32[1,128], index: 4, kind: input, shape index: {}]
  %s5 = inlined_call_operand.vmem [shape: f32[128,60], index: 5, kind: input, shape index: {}]
  %s6 = inlined_call_operand.vmem [shape: f32[1,60], index: 6, kind: input, shape index: {}]
  %s7 = inlined_call_operand.hbm [shape: f32[16,60], index: 7, kind: output, shape index: {}]
  %s8 = sld [smem:[#allocation0]]
  $region38: #{tpu_custom_call.1} parent=0
    _
  %s10 = ssub.s32 1, %s8
  %s11 = scalar_select 0, %s10, %s8
  $region1: #{tpu_custom_call.1} parent=0
    #allocation2 [shape = 'u8[8192]{0}', space=vmem, size = 0x2000, scoped, tag = 'output window, operand 0, single buffered']
    #allocation3 [shape = 's32[1]{0}', space=sflag, size = 0x4, scoped, tag = 'scoped memory for tpu_custom_call.1']
    %12 = vsyncpa [#allocation3], 0
    // Predicated region
    $region2: #{tpu_custom_call.1} parent=1 // pred_check
      _
    $region3: #{tpu_custom_call.1} parent=1 // pred_check_branch
      %14 = sbr.rel (0) target = $region5
    $region4: #{tpu_custom_call.1} parent=1 // pred_region
      _
    $region5: #{tpu_custom_call.1} parent=1 // pred_fallthru
      _
    // Predicated region
    $region6: #{tpu_custom_call.1} parent=1 // pred_check
      _
    $region7: #{tpu_custom_call.1} parent=1 // pred_check_branch
      %16 = sbr.rel (0) target = $region9
    $region8: #{tpu_custom_call.1} parent=1 // pred_region
      _
    $region9: #{tpu_custom_call.1} parent=1 // pred_fallthru
      _
    // Predicated region
    $region10: #{tpu_custom_call.1} parent=1 // pred_check
      _
    $region11: #{tpu_custom_call.1} parent=1 // pred_check_branch
      %18 = sbr.rel (0) target = $region13
    $region12: #{tpu_custom_call.1} parent=1 // pred_region
      _
    $region13: #{tpu_custom_call.1} parent=1 // pred_fallthru
      _
    // Predicated region
    $region14: #{tpu_custom_call.1} parent=1 // pred_check
      _
    $region15: #{tpu_custom_call.1} parent=1 // pred_check_branch
      %20 = sbr.rel (0) target = $region17
    $region16: #{tpu_custom_call.1} parent=1 // pred_region
      _
    $region17: #{tpu_custom_call.1} parent=1 // pred_fallthru
      _
    // Predicated region
    $region18: #{tpu_custom_call.1} parent=1 // pred_check
      _
    $region19: #{tpu_custom_call.1} parent=1 // pred_check_branch
      %22 = sbr.rel (0) target = $region21
    $region20: #{tpu_custom_call.1} parent=1 // pred_region
      _
    $region21: #{tpu_custom_call.1} parent=1 // pred_fallthru
      _
    // Predicated region
    $region22: #{tpu_custom_call.1} parent=1 // pred_check
      _
    $region23: #{tpu_custom_call.1} parent=1 // pred_check_branch
      %24 = sbr.rel (0) target = $region25
    $region24: #{tpu_custom_call.1} parent=1 // pred_region
      _
    $region25: #{tpu_custom_call.1} parent=1 // pred_fallthru
      _
    // Predicated region
    $region26: #{tpu_custom_call.1} parent=1 // pred_check
      _
    $region27: #{tpu_custom_call.1} parent=1 // pred_check_branch
      %26 = sbr.rel (0) target = $region29
    $region28: #{tpu_custom_call.1} parent=1 // pred_region
      _
    $region29: #{tpu_custom_call.1} parent=1 // pred_fallthru
      _
    %v27 = vld [vmem:[%s0] sm:$0xff]
    %v28 = vld [vmem:[%s0 + $0x8] sm:$0xff]
    %v29 = vld [vmem:[%s1] sm:$0xff]
    %v30 = vld [vmem:[%s1 + $0x8] sm:$0xff]
    %v31 = vld [vmem:[%s1 + $0x10] sm:$0xff]
    %v32 = vld [vmem:[%s1 + $0x18] sm:$0xff]
    %v33 = vld [vmem:[%s1 + $0x20] sm:$0xff]
    %v34 = vld [vmem:[%s1 + $0x28] sm:$0xff]
    %v35 = vld [vmem:[%s1 + $0x30] sm:$0xff]
    %v36 = vld [vmem:[%s1 + $0x38] sm:$0xff]
    %v37 = vld [vmem:[%s1 + $0x40] sm:$0xff]
    %v38 = vld [vmem:[%s1 + $0x48] sm:$0xff]
    %v39 = vld [vmem:[%s1 + $0x50] sm:$0xff]
    %v40 = vld [vmem:[%s1 + $0x58] sm:$0xff]
    %v41 = vld [vmem:[%s1 + $0x60] sm:$0xff]
    %v42 = vld [vmem:[%s1 + $0x68] sm:$0xff]
    %v43 = vld [vmem:[%s1 + $0x70] sm:$0xff]
    %v44 = vld [vmem:[%s1 + $0x78] sm:$0xff]
    %vm45 = vcmask 523264
    %v47 = vsel %vm45, %v27, 0
    %v50 = vsel %vm45, %v28, 0
    %52 = vmatpush.msra.mxu0 0.0
    %53 = vmatpush.msra.mxu0 0.0
    %54 = vmatpush.msra.mxu0 0.0
    %55 = vmatpush.msra.mxu0 0.0
    %56 = vmatpush.msra.mxu0 0.0
    %57 = vmatpush.msra.mxu0 0.0
    %58 = vmatpush.msra.mxu0 0.0
    %59 = vmatpush.msra.mxu0 0.0
    %60 = vmatpush.msra.mxu0 %v43
    %61 = vmatpush.msra.mxu0 %v41
    %62 = vmatpush.msra.mxu0 %v39
    %63 = vmatpush.msra.mxu0 %v37
    %64 = vmatpush.msra.mxu0 %v35
    %65 = vmatpush.msra.mxu0 %v33
    %66 = vmatpush.msra.mxu0 %v31
    %67 = vmatpush.msra.mxu0 %v29
    %68 = vmatmul.f32.gmra.mxu0 %v47
    %v69 = vpop.f32.mrf.mxu0
    %v70 = vadd.f32 0.0, %v69
    %71 = vmatmul.f32.gmra.mxu0 %v50
    %v72 = vpop.f32.mrf.mxu0
    %v73 = vadd.f32 0.0, %v72
    %74 = vdwg.mxu0
    %75 = vmatpush.msra.mxu0 0.0
    %76 = vmatpush.msra.mxu0 0.0
    %77 = vmatpush.msra.mxu0 0.0
    %78 = vmatpush.msra.mxu0 0.0
    %79 = vmatpush.msra.mxu0 0.0
    %80 = vmatpush.msra.mxu0 0.0
    %81 = vmatpush.msra.mxu0 0.0
    %82 = vmatpush.msra.mxu0 0.0
    %83 = vmatpush.msra.mxu0 %v44
    %84 = vmatpush.msra.mxu0 %v42
    %85 = vmatpush.msra.mxu0 %v40
    %86 = vmatpush.msra.mxu0 %v38
    %87 = vmatpush.msra.mxu0 %v36
    %88 = vmatpush.msra.mxu0 %v34
    %89 = vmatpush.msra.mxu0 %v32
    %90 = vmatpush.msra.mxu0 %v30
    %91 = vmatmul.f32.gmra.mxu0 %v47
    %v92 = vpop.f32.mrf.mxu0
    %v93 = vadd.f32 0.0, %v92
    %94 = vmatmul.f32.gmra.mxu0 %v50
    %v95 = vpop.f32.mrf.mxu0
    %v96 = vadd.f32 0.0, %v95
    %97 = vdwg.mxu0
    %v98 = vld [vmem:[%s2] sm:$0x1]
    %v100 = vperm.slane %v98, 0
    %v102 = vadd.f32 %v70, %v100
    %v103 = vadd.f32 %v73, %v100
    %104 = vadd.xlane.f32.xlu0 %v102
    %v105 = vpop.xlane.xlu0 %104
    %106 = vadd.xlane.f32.xlu0 %v103
    %v107 = vpop.xlane.xlu0 %106
    %v108 = vmul.f32 %v105, 0.03125
    %v109 = vmul.f32 %v107, 0.03125
    %v110 = vsub.f32 %v102, %v108
    %v111 = vsub.f32 %v103, %v109
    %v112 = vlaneseq
    %v113 = vand.u32 %v112, 127
    %vm114 = vcmp.lt.s32.totalorder %v113, 32
    %v115 = vmul.f32 %v110, %v110
    %v116 = vmul.f32 %v111, %v111
    %v117 = vsel %vm114, %v115, 0.0
    %v118 = vsel %vm114, %v116, 0.0
    %119 = vadd.xlane.f32.xlu0 %v117
    %v120 = vpop.xlane.xlu0 %119
    %121 = vadd.xlane.f32.xlu0 %v118
    %v122 = vpop.xlane.xlu0 %121
    %v123 = vmul.f32 %v120, 0.03125
    %v124 = vmul.f32 %v122, 0.03125
    %v125 = vadd.f32 %v123, 1e-05
    %v126 = vadd.f32 %v124, 1e-05
    %v127 = vrsqrt.pop %v125
    %v128 = vmul.f32 %v127, %v125
    %v129 = vmul.f32 %v128, %v127
    %v130 = vmul.f32 0.5, %v129
    %v131 = vsub.f32 1.5, %v130
    %v132 = vmul.f32 %v127, %v131
    %vm133 = vweird.f32 %v125
    %vm134 = vweird.f32 %v127
    %vm135 = vmor %vm133, %vm134
    %v136 = vsel %vm135, %v127, %v132
    %v137 = vrsqrt.pop %v126
    %v138 = vmul.f32 %v137, %v126
    %v139 = vmul.f32 %v138, %v137
    %v140 = vmul.f32 0.5, %v139
    %v141 = vsub.f32 1.5, %v140
    %v142 = vmul.f32 %v137, %v141
    %vm143 = vweird.f32 %v126
    %vm144 = vweird.f32 %v137
    %vm145 = vmor %vm143, %vm144
    %v146 = vsel %vm145, %v137, %v142
    %v147 = vmul.f32 %v110, %v136
    %v148 = vmul.f32 %v111, %v146
    %v149 = vld [vmem:[%s3] sm:$0x1]
    %v151 = vperm.slane %v149, 0
    %v153 = vmul.f32 %v147, %v151
    %v154 = vmul.f32 %v148, %v151
    %v155 = vld [vmem:[%s4] sm:$0x1]
    %v157 = vperm.slane %v155, 0
    %v159 = vadd.f32 %v153, %v157
    %v160 = vadd.f32 %v154, %v157
    %v161 = vmax.f32 %v159, 0.0
    %v162 = vmax.f32 %v160, 0.0
    %v163 = vld [vmem:[%s5] sm:$0xff]
    %v164 = vld [vmem:[%s5 + $0x8] sm:$0xff]
    %v165 = vld [vmem:[%s5 + $0x10] sm:$0xff]
    %v166 = vld [vmem:[%s5 + $0x18] sm:$0xff]
    %v167 = vld [vmem:[%s5 + $0x20] sm:$0xff]
    %v168 = vld [vmem:[%s5 + $0x28] sm:$0xff]
    %v169 = vld [vmem:[%s5 + $0x30] sm:$0xff]
    %v170 = vld [vmem:[%s5 + $0x38] sm:$0xff]
    %v171 = vld [vmem:[%s5 + $0x40] sm:$0xff]
    %v172 = vld [vmem:[%s5 + $0x48] sm:$0xff]
    %v173 = vld [vmem:[%s5 + $0x50] sm:$0xff]
    %v174 = vld [vmem:[%s5 + $0x58] sm:$0xff]
    %v175 = vld [vmem:[%s5 + $0x60] sm:$0xff]
    %v176 = vld [vmem:[%s5 + $0x68] sm:$0xff]
    %v177 = vld [vmem:[%s5 + $0x70] sm:$0xff]
    %v178 = vld [vmem:[%s5 + $0x78] sm:$0xff]
    %179 = vmatpush.msra.mxu0 %v178
    %180 = vmatpush.msra.mxu0 %v177
    %181 = vmatpush.msra.mxu0 %v176
    %182 = vmatpush.msra.mxu0 %v175
    %183 = vmatpush.msra.mxu0 %v174
    %184 = vmatpush.msra.mxu0 %v173
    %185 = vmatpush.msra.mxu0 %v172
    %186 = vmatpush.msra.mxu0 %v171
    %187 = vmatpush.msra.mxu0 %v170
    %188 = vmatpush.msra.mxu0 %v169
    %189 = vmatpush.msra.mxu0 %v168
    %190 = vmatpush.msra.mxu0 %v167
    %191 = vmatpush.msra.mxu0 %v166
    %192 = vmatpush.msra.mxu0 %v165
    %193 = vmatpush.msra.mxu0 %v164
    %194 = vmatpush.msra.mxu0 %v163
    %195 = vmatmul.f32.gmra.mxu0 %v161
    %v196 = vpop.f32.mrf.mxu0
    %v197 = vadd.f32 0.0, %v196
    %198 = vmatmul.f32.gmra.mxu0 %v162
    %v199 = vpop.f32.mrf.mxu0
    %v200 = vadd.f32 0.0, %v199
    %201 = vdwg.mxu0
    %v202 = vadd.f32 %v93, %v197
    %v203 = vadd.f32 %v96, %v200
    %v204 = vld [vmem:[%s6] sm:$0x1]
    %v206 = vperm.slane %v204, 0
    %v208 = vadd.f32 %v202, %v206
    %v209 = vadd.f32 %v203, %v206
    %vm210 = vcmask 490496
    %211 = vst.msk [vmem:[#allocation2] sm:$0xff] %vm210, %v208
    %212 = vst.msk [vmem:[#allocation2 + $0x8] sm:$0xff] %vm210, %v209
    // Predicated region
    $region30: #{tpu_custom_call.1} parent=1 // pred_check
      _
    $region31: #{tpu_custom_call.1} parent=1 // pred_check_branch
      %214 = sbr.rel (0) target = $region33
    $region32: #{tpu_custom_call.1} parent=1 // pred_region
      %216 = vsyncadd [#allocation3], 0
      %s217 = sshll.u32 [#allocation2], 4
      %s218 = int_to_ptr.vmem [resolvable:$true] %s217
      %s219 = sshll.u32 %s7, 4
      %s220 = int_to_ptr.hbm [resolvable:$true] %s219
      %225 = dma.vmem_to_hbm [thread:$0]  %s218, 256, %s220, [#allocation3], 128, 128, 8
    $region33: #{tpu_custom_call.1} parent=1 // pred_fallthru
      _
    // Predicated region
    $region34: #{tpu_custom_call.1} parent=1 // pred_check
      _
    $region35: #{tpu_custom_call.1} parent=1 // pred_check_branch
      %227 = sbr.rel (0) target = $region37
    $region36: #{tpu_custom_call.1} parent=1 // pred_region
      %229 = dma.done [#allocation3], 256
    $region37: #{tpu_custom_call.1} parent=1 // pred_fallthru
      _
    %230 = vsyncpa [#allocation3], 1

// kernel: tpu_custom_call.1
$region0: #{tpu_custom_call.1}
  #allocation0 [shape = 'u32[]', space=smem, size = 0x4, offset = 0x4, fixed_abs, tag = 'smem constant byte address 0x4 - core index']
  #allocation1 [shape = 'u32[72,128]{1,0:T(1,128)}', space=vmem, size = 0x9000, scoped, tag = 'internal scratch']
  %s0 = inlined_call_operand.vmem [shape: f32[16,64], index: 0, kind: input, shape index: {}]
  %s1 = inlined_call_operand.vmem [shape: f32[64,188], index: 1, kind: input, shape index: {}]
  %s2 = inlined_call_operand.vmem [shape: f32[1,128], index: 2, kind: input, shape index: {}]
  %s3 = inlined_call_operand.vmem [shape: f32[1,128], index: 3, kind: input, shape index: {}]
  %s4 = inlined_call_operand.vmem [shape: f32[1,128], index: 4, kind: input, shape index: {}]
  %s5 = inlined_call_operand.vmem [shape: f32[128,60], index: 5, kind: input, shape index: {}]
  %s6 = inlined_call_operand.vmem [shape: f32[1,60], index: 6, kind: input, shape index: {}]
  %s7 = inlined_call_operand.hbm [shape: f32[16,60], index: 7, kind: output, shape index: {}]
  %s8 = sld [smem:[#allocation0]]
  $region38: #{tpu_custom_call.1} parent=0
    _
  %s10 = ssub.s32 1, %s8
  %s11 = scalar_select 0, %s10, %s8
  $region1: #{tpu_custom_call.1} parent=0
    #allocation2 [shape = 'u8[8192]{0}', space=vmem, size = 0x2000, scoped, tag = 'output window, operand 0, single buffered']
    #allocation3 [shape = 's32[1]{0}', space=sflag, size = 0x4, scoped, tag = 'scoped memory for tpu_custom_call.1']
    %12 = vsyncpa [#allocation3], 0
    // Predicated region
    $region2: #{tpu_custom_call.1} parent=1 // pred_check
      _
    $region3: #{tpu_custom_call.1} parent=1 // pred_check_branch
      %14 = sbr.rel (0) target = $region5
    $region4: #{tpu_custom_call.1} parent=1 // pred_region
      _
    $region5: #{tpu_custom_call.1} parent=1 // pred_fallthru
      _
    // Predicated region
    $region6: #{tpu_custom_call.1} parent=1 // pred_check
      _
    $region7: #{tpu_custom_call.1} parent=1 // pred_check_branch
      %16 = sbr.rel (0) target = $region9
    $region8: #{tpu_custom_call.1} parent=1 // pred_region
      _
    $region9: #{tpu_custom_call.1} parent=1 // pred_fallthru
      _
    // Predicated region
    $region10: #{tpu_custom_call.1} parent=1 // pred_check
      _
    $region11: #{tpu_custom_call.1} parent=1 // pred_check_branch
      %18 = sbr.rel (0) target = $region13
    $region12: #{tpu_custom_call.1} parent=1 // pred_region
      _
    $region13: #{tpu_custom_call.1} parent=1 // pred_fallthru
      _
    // Predicated region
    $region14: #{tpu_custom_call.1} parent=1 // pred_check
      _
    $region15: #{tpu_custom_call.1} parent=1 // pred_check_branch
      %20 = sbr.rel (0) target = $region17
    $region16: #{tpu_custom_call.1} parent=1 // pred_region
      _
    $region17: #{tpu_custom_call.1} parent=1 // pred_fallthru
      _
    // Predicated region
    $region18: #{tpu_custom_call.1} parent=1 // pred_check
      _
    $region19: #{tpu_custom_call.1} parent=1 // pred_check_branch
      %22 = sbr.rel (0) target = $region21
    $region20: #{tpu_custom_call.1} parent=1 // pred_region
      _
    $region21: #{tpu_custom_call.1} parent=1 // pred_fallthru
      _
    // Predicated region
    $region22: #{tpu_custom_call.1} parent=1 // pred_check
      _
    $region23: #{tpu_custom_call.1} parent=1 // pred_check_branch
      %24 = sbr.rel (0) target = $region25
    $region24: #{tpu_custom_call.1} parent=1 // pred_region
      _
    $region25: #{tpu_custom_call.1} parent=1 // pred_fallthru
      _
    // Predicated region
    $region26: #{tpu_custom_call.1} parent=1 // pred_check
      _
    $region27: #{tpu_custom_call.1} parent=1 // pred_check_branch
      %26 = sbr.rel (0) target = $region29
    $region28: #{tpu_custom_call.1} parent=1 // pred_region
      _
    $region29: #{tpu_custom_call.1} parent=1 // pred_fallthru
      _
    %v27 = vld [vmem:[%s0] sm:$0xff]
    %v28 = vld [vmem:[%s0 + $0x8] sm:$0xff]
    %v29 = vld [vmem:[%s1] sm:$0xff]
    %v30 = vld [vmem:[%s1 + $0x8] sm:$0xff]
    %v31 = vld [vmem:[%s1 + $0x10] sm:$0xff]
    %v32 = vld [vmem:[%s1 + $0x18] sm:$0xff]
    %v33 = vld [vmem:[%s1 + $0x20] sm:$0xff]
    %v34 = vld [vmem:[%s1 + $0x28] sm:$0xff]
    %v35 = vld [vmem:[%s1 + $0x30] sm:$0xff]
    %v36 = vld [vmem:[%s1 + $0x38] sm:$0xff]
    %v37 = vld [vmem:[%s1 + $0x40] sm:$0xff]
    %v38 = vld [vmem:[%s1 + $0x48] sm:$0xff]
    %v39 = vld [vmem:[%s1 + $0x50] sm:$0xff]
    %v40 = vld [vmem:[%s1 + $0x58] sm:$0xff]
    %v41 = vld [vmem:[%s1 + $0x60] sm:$0xff]
    %v42 = vld [vmem:[%s1 + $0x68] sm:$0xff]
    %v43 = vld [vmem:[%s1 + $0x70] sm:$0xff]
    %v44 = vld [vmem:[%s1 + $0x78] sm:$0xff]
    %vm45 = vcmask 523264
    %v47 = vsel %vm45, %v27, 0
    %v50 = vsel %vm45, %v28, 0
    %52 = vmatpush.msra.mxu0 0.0
    %53 = vmatpush.msra.mxu0 0.0
    %54 = vmatpush.msra.mxu0 0.0
    %55 = vmatpush.msra.mxu0 0.0
    %56 = vmatpush.msra.mxu0 0.0
    %57 = vmatpush.msra.mxu0 0.0
    %58 = vmatpush.msra.mxu0 0.0
    %59 = vmatpush.msra.mxu0 0.0
    %60 = vmatpush.msra.mxu0 %v43
    %61 = vmatpush.msra.mxu0 %v41
    %62 = vmatpush.msra.mxu0 %v39
    %63 = vmatpush.msra.mxu0 %v37
    %64 = vmatpush.msra.mxu0 %v35
    %65 = vmatpush.msra.mxu0 %v33
    %66 = vmatpush.msra.mxu0 %v31
    %67 = vmatpush.msra.mxu0 %v29
    %68 = vmatmul.f32.gmra.mxu0 %v47
    %v69 = vpop.f32.mrf.mxu0
    %v70 = vadd.f32 0.0, %v69
    %71 = vmatmul.f32.gmra.mxu0 %v50
    %v72 = vpop.f32.mrf.mxu0
    %v73 = vadd.f32 0.0, %v72
    %74 = vdwg.mxu0
    %75 = vmatpush.msra.mxu0 0.0
    %76 = vmatpush.msra.mxu0 0.0
    %77 = vmatpush.msra.mxu0 0.0
    %78 = vmatpush.msra.mxu0 0.0
    %79 = vmatpush.msra.mxu0 0.0
    %80 = vmatpush.msra.mxu0 0.0
    %81 = vmatpush.msra.mxu0 0.0
    %82 = vmatpush.msra.mxu0 0.0
    %83 = vmatpush.msra.mxu0 %v44
    %84 = vmatpush.msra.mxu0 %v42
    %85 = vmatpush.msra.mxu0 %v40
    %86 = vmatpush.msra.mxu0 %v38
    %87 = vmatpush.msra.mxu0 %v36
    %88 = vmatpush.msra.mxu0 %v34
    %89 = vmatpush.msra.mxu0 %v32
    %90 = vmatpush.msra.mxu0 %v30
    %91 = vmatmul.f32.gmra.mxu0 %v47
    %v92 = vpop.f32.mrf.mxu0
    %v93 = vadd.f32 0.0, %v92
    %94 = vmatmul.f32.gmra.mxu0 %v50
    %v95 = vpop.f32.mrf.mxu0
    %v96 = vadd.f32 0.0, %v95
    %97 = vdwg.mxu0
    %v98 = vld [vmem:[%s2] sm:$0x1]
    %v100 = vperm.slane %v98, 0
    %v102 = vadd.f32 %v70, %v100
    %v103 = vadd.f32 %v73, %v100
    %104 = vadd.xlane.f32.xlu0 %v102
    %v105 = vpop.xlane.xlu0 %104
    %106 = vadd.xlane.f32.xlu0 %v103
    %v107 = vpop.xlane.xlu0 %106
    %v108 = vmul.f32 %v105, 0.03125
    %v109 = vmul.f32 %v107, 0.03125
    %v110 = vsub.f32 %v102, %v108
    %v111 = vsub.f32 %v103, %v109
    %v112 = vlaneseq
    %v113 = vand.u32 %v112, 127
    %vm114 = vcmp.lt.s32.totalorder %v113, 32
    %v115 = vmul.f32 %v110, %v110
    %v116 = vmul.f32 %v111, %v111
    %v117 = vsel %vm114, %v115, 0.0
    %v118 = vsel %vm114, %v116, 0.0
    %119 = vadd.xlane.f32.xlu0 %v117
    %v120 = vpop.xlane.xlu0 %119
    %121 = vadd.xlane.f32.xlu0 %v118
    %v122 = vpop.xlane.xlu0 %121
    %v123 = vmul.f32 %v120, 0.03125
    %v124 = vmul.f32 %v122, 0.03125
    %v125 = vadd.f32 %v123, 1e-05
    %v126 = vadd.f32 %v124, 1e-05
    %v127 = vrsqrt.pop %v125
    %v128 = vmul.f32 %v127, %v125
    %v129 = vmul.f32 %v128, %v127
    %v130 = vmul.f32 0.5, %v129
    %v131 = vsub.f32 1.5, %v130
    %v132 = vmul.f32 %v127, %v131
    %vm133 = vweird.f32 %v125
    %vm134 = vweird.f32 %v127
    %vm135 = vmor %vm133, %vm134
    %v136 = vsel %vm135, %v127, %v132
    %v137 = vrsqrt.pop %v126
    %v138 = vmul.f32 %v137, %v126
    %v139 = vmul.f32 %v138, %v137
    %v140 = vmul.f32 0.5, %v139
    %v141 = vsub.f32 1.5, %v140
    %v142 = vmul.f32 %v137, %v141
    %vm143 = vweird.f32 %v126
    %vm144 = vweird.f32 %v137
    %vm145 = vmor %vm143, %vm144
    %v146 = vsel %vm145, %v137, %v142
    %v147 = vmul.f32 %v110, %v136
    %v148 = vmul.f32 %v111, %v146
    %v149 = vld [vmem:[%s3] sm:$0x1]
    %v151 = vperm.slane %v149, 0
    %v153 = vmul.f32 %v147, %v151
    %v154 = vmul.f32 %v148, %v151
    %v155 = vld [vmem:[%s4] sm:$0x1]
    %v157 = vperm.slane %v155, 0
    %v159 = vadd.f32 %v153, %v157
    %v160 = vadd.f32 %v154, %v157
    %v161 = vmax.f32 %v159, 0.0
    %v162 = vmax.f32 %v160, 0.0
    %v163 = vld [vmem:[%s5] sm:$0xff]
    %v164 = vld [vmem:[%s5 + $0x8] sm:$0xff]
    %v165 = vld [vmem:[%s5 + $0x10] sm:$0xff]
    %v166 = vld [vmem:[%s5 + $0x18] sm:$0xff]
    %v167 = vld [vmem:[%s5 + $0x20] sm:$0xff]
    %v168 = vld [vmem:[%s5 + $0x28] sm:$0xff]
    %v169 = vld [vmem:[%s5 + $0x30] sm:$0xff]
    %v170 = vld [vmem:[%s5 + $0x38] sm:$0xff]
    %v171 = vld [vmem:[%s5 + $0x40] sm:$0xff]
    %v172 = vld [vmem:[%s5 + $0x48] sm:$0xff]
    %v173 = vld [vmem:[%s5 + $0x50] sm:$0xff]
    %v174 = vld [vmem:[%s5 + $0x58] sm:$0xff]
    %v175 = vld [vmem:[%s5 + $0x60] sm:$0xff]
    %v176 = vld [vmem:[%s5 + $0x68] sm:$0xff]
    %v177 = vld [vmem:[%s5 + $0x70] sm:$0xff]
    %v178 = vld [vmem:[%s5 + $0x78] sm:$0xff]
    %179 = vmatpush.msra.mxu0 %v178
    %180 = vmatpush.msra.mxu0 %v177
    %181 = vmatpush.msra.mxu0 %v176
    %182 = vmatpush.msra.mxu0 %v175
    %183 = vmatpush.msra.mxu0 %v174
    %184 = vmatpush.msra.mxu0 %v173
    %185 = vmatpush.msra.mxu0 %v172
    %186 = vmatpush.msra.mxu0 %v171
    %187 = vmatpush.msra.mxu0 %v170
    %188 = vmatpush.msra.mxu0 %v169
    %189 = vmatpush.msra.mxu0 %v168
    %190 = vmatpush.msra.mxu0 %v167
    %191 = vmatpush.msra.mxu0 %v166
    %192 = vmatpush.msra.mxu0 %v165
    %193 = vmatpush.msra.mxu0 %v164
    %194 = vmatpush.msra.mxu0 %v163
    %195 = vmatmul.f32.gmra.mxu0 %v161
    %v196 = vpop.f32.mrf.mxu0
    %v197 = vadd.f32 0.0, %v196
    %198 = vmatmul.f32.gmra.mxu0 %v162
    %v199 = vpop.f32.mrf.mxu0
    %v200 = vadd.f32 0.0, %v199
    %201 = vdwg.mxu0
    %v202 = vadd.f32 %v93, %v197
    %v203 = vadd.f32 %v96, %v200
    %v204 = vld [vmem:[%s6] sm:$0x1]
    %v206 = vperm.slane %v204, 0
    %v208 = vadd.f32 %v202, %v206
    %v209 = vadd.f32 %v203, %v206
    %vm210 = vcmask 490496
    %211 = vst.msk [vmem:[#allocation2] sm:$0xff] %vm210, %v208
    %212 = vst.msk [vmem:[#allocation2 + $0x8] sm:$0xff] %vm210, %v209
    // Predicated region
    $region30: #{tpu_custom_call.1} parent=1 // pred_check
      _
    $region31: #{tpu_custom_call.1} parent=1 // pred_check_branch
      %214 = sbr.rel (0) target = $region33
    $region32: #{tpu_custom_call.1} parent=1 // pred_region
      %216 = vsyncadd [#allocation3], 0
      %s217 = sshll.u32 [#allocation2], 4
      %s218 = int_to_ptr.vmem [resolvable:$true] %s217
      %s219 = sshll.u32 %s7, 4
      %s220 = int_to_ptr.hbm [resolvable:$true] %s219
      %225 = dma.vmem_to_hbm [thread:$0]  %s218, 256, %s220, [#allocation3], 128, 128, 8
    $region33: #{tpu_custom_call.1} parent=1 // pred_fallthru
      _
    // Predicated region
    $region34: #{tpu_custom_call.1} parent=1 // pred_check
      _
    $region35: #{tpu_custom_call.1} parent=1 // pred_check_branch
      %227 = sbr.rel (0) target = $region37
    $region36: #{tpu_custom_call.1} parent=1 // pred_region
      %229 = dma.done [#allocation3], 256
    $region37: #{tpu_custom_call.1} parent=1 // pred_fallthru
      _
    %230 = vsyncpa [#allocation3], 1

</llo_original>
